<compile_context>
chip_gen: v7x
topology: tpu7x:2x2x1
jax: 0.10.0
libtpu: 0.0.40
codegen_flags: <defaults>
</compile_context>

<pallas_src>
import functools

import jax
import jax.numpy as jnp
from jax import lax
from jax.experimental import pallas as pl
from jax.experimental.pallas import tpu as pltpu

LN_EPS = 1e-5


def _dynamic_mlp_a_kernel(img_ref, loc_ref, w_ref, b_ref, gamma_ref, beta_ref,
                          out_ref, *, inplanes, planes, sub_n):
    # img_ref:   (TN, I)      tile of img_fea
    # loc_ref:   (TN, L)      tile of loc_fea
    # w_ref:     (L, I*P)     Linear weight, transposed (f32, resident)
    # b_ref:     (1, I*P)     Linear bias row (f32, resident)
    # gamma_ref: (1, P)       LayerNorm weight (f32, resident)
    # beta_ref:  (1, P)       LayerNorm bias (f32, resident)
    # out_ref:   (TN, P)
    tile_n = img_ref.shape[0]
    num_sub = tile_n // sub_n

    # Resident params: load once per grid step, reuse across sub-chunks.
    w = w_ref[...]           # [L, I*P]
    b = b_ref[...]           # [1, I*P]
    gamma = gamma_ref[...]   # [1, P]
    beta = beta_ref[...]     # [1, P]

    @pl.loop(0, num_sub)
    def _(c):
        row0 = pl.multiple_of(c * sub_n, sub_n)
        loc = loc_ref[pl.ds(row0, sub_n), :].astype(jnp.float32)   # [S, L]
        img = img_ref[pl.ds(row0, sub_n), :].astype(jnp.float32)   # [S, I]

        # One fused MXU contraction per sub-chunk: all dynamic weights
        # (Linear output incl. bias) for these S samples.
        t = jnp.dot(loc, w, preferred_element_type=jnp.float32) + b   # [S, I*P]

        # bmm(img[:, None, :], weight).squeeze(1): per output-channel-group
        # lane-slice FMAs (no extra matmuls, no reshapes).
        y = img[:, 0:1] * t[:, 0:planes]
        for i in range(1, inplanes):
            y = y + img[:, i:i + 1] * t[:, i * planes:(i + 1) * planes]

        # LayerNorm over the last axis (biased variance, like torch LayerNorm).
        mean = jnp.mean(y, axis=-1, keepdims=True)
        ctr = y - mean
        var = jnp.mean(ctr * ctr, axis=-1, keepdims=True)
        y = ctr * lax.rsqrt(var + LN_EPS)
        y = y * gamma + beta

        # ReLU + store.
        out_ref[pl.ds(row0, sub_n), :] = jnp.maximum(y, 0.0).astype(out_ref.dtype)


def dynamic_mlp_a(img_fea, loc_fea, lin_w, lin_b, ln_gamma, ln_beta,
                  *, inplanes, planes, tile_n=4096, sub_n=256):
    """Pallas implementation of Dynamic_MLP_A.forward.

    img_fea:  [N, inplanes]
    loc_fea:  [N, loc_planes]
    lin_w:    [inplanes*planes, loc_planes]   (PyTorch Linear.weight layout)
    lin_b:    [inplanes*planes]
    ln_gamma: [planes]
    ln_beta:  [planes]
    returns:  [N, planes]
    """
    n, i_ch = img_fea.shape
    n2, l = loc_fea.shape
    assert i_ch == inplanes and n2 == n
    assert lin_w.shape == (inplanes * planes, l)

    # Sublane-aligned tile sizes.
    tile_n = max(8, (int(tile_n) // 8) * 8)
    sub_n = max(8, (int(sub_n) // 8) * 8)

    # Keep >= 2 grid steps whenever N allows: the parallel grid axis is how
    # work shards across the two TensorCores on v7x.
    half = max(8, pl.cdiv(pl.cdiv(n, 2), 8) * 8)
    tile_n = min(tile_n, half)
    sub_n = min(sub_n, tile_n)
    tile_n = pl.cdiv(tile_n, sub_n) * sub_n   # tile = whole number of sub-chunks

    # Pad batch to a multiple of tile_n (zero rows stay finite through LN and
    # are sliced off below).
    n_pad = pl.cdiv(n, tile_n) * tile_n
    if n_pad != n:
        pad = n_pad - n
        img_fea = jnp.pad(img_fea, ((0, pad), (0, 0)))
        loc_fea = jnp.pad(loc_fea, ((0, pad), (0, 0)))

    # Parameter glue, done once in the wrapper (f32, resident across steps).
    w_all = lin_w.T.astype(jnp.float32)                               # [L, I*P]
    b_row = lin_b.reshape(1, inplanes * planes).astype(jnp.float32)   # [1, I*P]
    gamma = ln_gamma.reshape(1, planes).astype(jnp.float32)
    beta = ln_beta.reshape(1, planes).astype(jnp.float32)

    grid = (n_pad // tile_n,)
    kernel = functools.partial(_dynamic_mlp_a_kernel, inplanes=inplanes,
                               planes=planes, sub_n=sub_n)

    out = pl.pallas_call(
        kernel,
        out_shape=jax.ShapeDtypeStruct((n_pad, planes), img_fea.dtype),
        grid_spec=pltpu.PrefetchScalarGridSpec(
            num_scalar_prefetch=0,
            grid=grid,
            in_specs=[
                pl.BlockSpec((tile_n, inplanes), lambda g: (g, 0)),        # img
                pl.BlockSpec((tile_n, l), lambda g: (g, 0)),               # loc
                pl.BlockSpec((l, inplanes * planes), lambda g: (0, 0)),    # W^T
                pl.BlockSpec((1, inplanes * planes), lambda g: (0, 0)),    # bias
                pl.BlockSpec((1, planes), lambda g: (0, 0)),               # gamma
                pl.BlockSpec((1, planes), lambda g: (0, 0)),               # beta
            ],
            out_specs=pl.BlockSpec((tile_n, planes), lambda g: (g, 0)),
        ),
        compiler_params=pltpu.CompilerParams(
            dimension_semantics=("parallel",)),
    )(img_fea, loc_fea, w_all, b_row, gamma, beta)

    return out[:n]


def _reference(img_fea, loc_fea, lin_w, lin_b, ln_gamma, ln_beta,
               *, inplanes, planes):
    n = img_fea.shape[0]
    w = loc_fea @ lin_w.T + lin_b                       # [N, I*P]
    w = w.reshape(n, inplanes, planes)
    y = jnp.einsum('ni,nip->np', img_fea, w)
    mean = jnp.mean(y, axis=-1, keepdims=True)
    var = jnp.mean((y - mean) ** 2, axis=-1, keepdims=True)
    y = (y - mean) / jnp.sqrt(var + LN_EPS)
    y = y * ln_gamma + ln_beta
    return jnp.maximum(y, 0.0)


if __name__ == "__main__":
    INPLANES = 8    # img_fea channels
    PLANES = 32     # output channels
    LOC_PLANES = 8  # loc_fea channels

    key = jax.random.PRNGKey(0)
    k_w, k_b, k_g, k_be, k_data = jax.random.split(key, 5)

    # Deterministic synthetic parameters (PyTorch layouts).
    lin_w = 0.1 * jax.random.normal(k_w, (INPLANES * PLANES, LOC_PLANES),
                                    dtype=jnp.float32)   # Linear.weight [out, in]
    lin_b = 0.1 * jax.random.normal(k_b, (INPLANES * PLANES,), dtype=jnp.float32)
    ln_gamma = 1.0 + 0.05 * jax.random.normal(k_g, (PLANES,), dtype=jnp.float32)
    ln_beta = 0.05 * jax.random.normal(k_be, (PLANES,), dtype=jnp.float32)

    ok = True
    # Case 1: small, non-multiple-of-tile batch (exercises padding / tiny tile).
    # Case 2: larger batch (exercises 2 grid steps x multiple sub-chunks).
    for case_n in (22, 1024):
        k_img, k_loc, k_data = jax.random.split(k_data, 3)
        img_fea = jax.random.normal(k_img, (case_n, INPLANES), dtype=jnp.float32)
        loc_fea = jax.random.normal(k_loc, (case_n, LOC_PLANES), dtype=jnp.float32)

        out = dynamic_mlp_a(img_fea, loc_fea, lin_w, lin_b, ln_gamma, ln_beta,
                            inplanes=INPLANES, planes=PLANES)
        out = jax.block_until_ready(out)

        ref = _reference(img_fea, loc_fea, lin_w, lin_b, ln_gamma, ln_beta,
                         inplanes=INPLANES, planes=PLANES)

        assert out.shape == (case_n, PLANES)
        # Tolerance accounts for TPU default single-pass-bf16 MXU precision
        # (both kernel and reference use default precision, but with different
        # accumulation orders).  Structural bugs produce O(1) errors.
        ok = ok and bool(jnp.allclose(out, ref, atol=2e-2, rtol=2e-2))

    assert ok, "mismatch vs reference"
    print("KERNEL_OK")
</pallas_src>

<mosaic_0001>
module attributes {stable_mosaic.version = 11 : i64} {
  func.func @_dynamic_mlp_a_kernel(%arg0: i32, %arg1: memref<16x8xf32, #tpu.memory_space<vmem>>, %arg2: memref<16x8xf32, #tpu.memory_space<vmem>>, %arg3: memref<8x256xf32, #tpu.memory_space<vmem>>, %arg4: memref<1x256xf32, #tpu.memory_space<vmem>>, %arg5: memref<1x32xf32, #tpu.memory_space<vmem>>, %arg6: memref<1x32xf32, #tpu.memory_space<vmem>>, %arg7: memref<16x32xf32, #tpu.memory_space<vmem>>) attributes {dimension_semantics = [#tpu.dimension_semantics<parallel>], iteration_bounds = array<i64: 2>, scalar_prefetch = 0 : i64, scratch_operands = 0 : i64, tpu.core_type = #tpu.core_type<tc>, window_params = [{transform_indices = @transform_0, window_bounds = array<i64: 16, 8>}, {transform_indices = @transform_1, window_bounds = array<i64: 16, 8>}, {pipeline_mode = #tpu.pipeline_mode<synchronous>, transform_indices = @transform_2, window_bounds = array<i64: 8, 256>}, {pipeline_mode = #tpu.pipeline_mode<synchronous>, transform_indices = @transform_3, window_bounds = array<i64: 1, 256>}, {pipeline_mode = #tpu.pipeline_mode<synchronous>, transform_indices = @transform_4, window_bounds = array<i64: 1, 32>}, {pipeline_mode = #tpu.pipeline_mode<synchronous>, transform_indices = @transform_5, window_bounds = array<i64: 1, 32>}, {transform_indices = @transform_6, window_bounds = array<i64: 16, 32>}]} {
    %c0 = arith.constant 0 : index
    %c0_0 = arith.constant 0 : index
    %0 = vector.load %arg3[%c0, %c0_0] : memref<8x256xf32, #tpu.memory_space<vmem>>, vector<8x256xf32>
    %c0_1 = arith.constant 0 : index
    %c0_2 = arith.constant 0 : index
    %1 = vector.load %arg4[%c0_1, %c0_2] : memref<1x256xf32, #tpu.memory_space<vmem>>, vector<1x256xf32>
    %c0_3 = arith.constant 0 : index
    %c0_4 = arith.constant 0 : index
    %2 = vector.load %arg5[%c0_3, %c0_4] : memref<1x32xf32, #tpu.memory_space<vmem>>, vector<1x32xf32>
    %c0_5 = arith.constant 0 : index
    %c0_6 = arith.constant 0 : index
    %3 = vector.load %arg6[%c0_5, %c0_6] : memref<1x32xf32, #tpu.memory_space<vmem>>, vector<1x32xf32>
    %c0_i32 = arith.constant 0 : i32
    %c1_i32 = arith.constant 1 : i32
    %4 = arith.muli %c0_i32, %c1_i32 : i32
    %c0_i32_7 = arith.constant 0 : i32
    %5 = arith.addi %c0_i32_7, %4 : i32
    %c16_i32 = arith.constant 16 : i32
    %6 = arith.muli %5, %c16_i32 : i32
    %7 = tpu.assume_multiple %6, 16 : i32
    %8 = arith.index_cast %7 : i32 to index
    %c0_8 = arith.constant 0 : index
    %9 = vector.load %arg2[%8, %c0_8] : memref<16x8xf32, #tpu.memory_space<vmem>>, vector<16x8xf32>
    %10 = arith.index_cast %7 : i32 to index
    %c0_9 = arith.constant 0 : index
    %11 = vector.load %arg1[%10, %c0_9] : memref<16x8xf32, #tpu.memory_space<vmem>>, vector<16x8xf32>
    %cst = arith.constant dense<0.000000e+00> : vector<16x256xf32>
    %12 = tpu.matmul %9, %0, %cst {dimension_numbers = #tpu.dot_dimension_numbers<[1], [0], [0], [1], [0, 0, 1, 1], [], []>} : vector<16x8xf32>, vector<8x256xf32>, vector<16x256xf32> -> vector<16x256xf32>
    %13 = vector.broadcast %1 : vector<1x256xf32> to vector<16x256xf32>
    %14 = arith.addf %12, %13 : vector<16x256xf32>
    %15 = vector.extract_strided_slice %11 {offsets = [0, 0], sizes = [16, 1], strides = [1, 1]} : vector<16x8xf32> to vector<16x1xf32>
    %16 = vector.extract_strided_slice %14 {offsets = [0, 0], sizes = [16, 32], strides = [1, 1]} : vector<16x256xf32> to vector<16x32xf32>
    %17 = vector.broadcast %15 : vector<16x1xf32> to vector<16x32xf32>
    %18 = arith.mulf %17, %16 : vector<16x32xf32>
    %19 = vector.extract_strided_slice %11 {offsets = [0, 1], sizes = [16, 1], strides = [1, 1]} : vector<16x8xf32> to vector<16x1xf32>
    %20 = vector.extract_strided_slice %14 {offsets = [0, 32], sizes = [16, 32], strides = [1, 1]} : vector<16x256xf32> to vector<16x32xf32>
    %21 = vector.broadcast %19 : vector<16x1xf32> to vector<16x32xf32>
    %22 = arith.mulf %21, %20 : vector<16x32xf32>
    %23 = arith.addf %18, %22 : vector<16x32xf32>
    %24 = vector.extract_strided_slice %11 {offsets = [0, 2], sizes = [16, 1], strides = [1, 1]} : vector<16x8xf32> to vector<16x1xf32>
    %25 = vector.extract_strided_slice %14 {offsets = [0, 64], sizes = [16, 32], strides = [1, 1]} : vector<16x256xf32> to vector<16x32xf32>
    %26 = vector.broadcast %24 : vector<16x1xf32> to vector<16x32xf32>
    %27 = arith.mulf %26, %25 : vector<16x32xf32>
    %28 = arith.addf %23, %27 : vector<16x32xf32>
    %29 = vector.extract_strided_slice %11 {offsets = [0, 3], sizes = [16, 1], strides = [1, 1]} : vector<16x8xf32> to vector<16x1xf32>
    %30 = vector.extract_strided_slice %14 {offsets = [0, 96], sizes = [16, 32], strides = [1, 1]} : vector<16x256xf32> to vector<16x32xf32>
    %31 = vector.broadcast %29 : vector<16x1xf32> to vector<16x32xf32>
    %32 = arith.mulf %31, %30 : vector<16x32xf32>
    %33 = arith.addf %28, %32 : vector<16x32xf32>
    %34 = vector.extract_strided_slice %11 {offsets = [0, 4], sizes = [16, 1], strides = [1, 1]} : vector<16x8xf32> to vector<16x1xf32>
    %35 = vector.extract_strided_slice %14 {offsets = [0, 128], sizes = [16, 32], strides = [1, 1]} : vector<16x256xf32> to vector<16x32xf32>
    %36 = vector.broadcast %34 : vector<16x1xf32> to vector<16x32xf32>
    %37 = arith.mulf %36, %35 : vector<16x32xf32>
    %38 = arith.addf %33, %37 : vector<16x32xf32>
    %39 = vector.extract_strided_slice %11 {offsets = [0, 5], sizes = [16, 1], strides = [1, 1]} : vector<16x8xf32> to vector<16x1xf32>
    %40 = vector.extract_strided_slice %14 {offsets = [0, 160], sizes = [16, 32], strides = [1, 1]} : vector<16x256xf32> to vector<16x32xf32>
    %41 = vector.broadcast %39 : vector<16x1xf32> to vector<16x32xf32>
    %42 = arith.mulf %41, %40 : vector<16x32xf32>
    %43 = arith.addf %38, %42 : vector<16x32xf32>
    %44 = vector.extract_strided_slice %11 {offsets = [0, 6], sizes = [16, 1], strides = [1, 1]} : vector<16x8xf32> to vector<16x1xf32>
    %45 = vector.extract_strided_slice %14 {offsets = [0, 192], sizes = [16, 32], strides = [1, 1]} : vector<16x256xf32> to vector<16x32xf32>
    %46 = vector.broadcast %44 : vector<16x1xf32> to vector<16x32xf32>
    %47 = arith.mulf %46, %45 : vector<16x32xf32>
    %48 = arith.addf %43, %47 : vector<16x32xf32>
    %49 = vector.extract_strided_slice %11 {offsets = [0, 7], sizes = [16, 1], strides = [1, 1]} : vector<16x8xf32> to vector<16x1xf32>
    %50 = vector.extract_strided_slice %14 {offsets = [0, 224], sizes = [16, 32], strides = [1, 1]} : vector<16x256xf32> to vector<16x32xf32>
    %51 = vector.broadcast %49 : vector<16x1xf32> to vector<16x32xf32>
    %52 = arith.mulf %51, %50 : vector<16x32xf32>
    %53 = arith.addf %48, %52 : vector<16x32xf32>
    %cst_10 = arith.constant dense<0.000000e+00> : vector<16xf32>
    %54 = vector.multi_reduction <add>, %53, %cst_10 [1] : vector<16x32xf32> to vector<16xf32>
    %55 = vector.shape_cast %54 : vector<16xf32> to vector<16x1xf32>
    %cst_11 = arith.constant 3.200000e+01 : f32
    %56 = vector.broadcast %cst_11 : f32 to vector<16x1xf32>
    %57 = arith.divf %55, %56 : vector<16x1xf32>
    %58 = vector.broadcast %57 : vector<16x1xf32> to vector<16x32xf32>
    %59 = arith.subf %53, %58 : vector<16x32xf32>
    %60 = arith.mulf %59, %59 : vector<16x32xf32>
    %cst_12 = arith.constant dense<0.000000e+00> : vector<16xf32>
    %61 = vector.multi_reduction <add>, %60, %cst_12 [1] : vector<16x32xf32> to vector<16xf32>
    %62 = vector.shape_cast %61 : vector<16xf32> to vector<16x1xf32>
    %cst_13 = arith.constant 3.200000e+01 : f32
    %63 = vector.broadcast %cst_13 : f32 to vector<16x1xf32>
    %64 = arith.divf %62, %63 : vector<16x1xf32>
    %cst_14 = arith.constant 9.99999974E-6 : f32
    %65 = vector.broadcast %cst_14 : f32 to vector<16x1xf32>
    %66 = arith.addf %64, %65 : vector<16x1xf32>
    %67 = math.rsqrt %66 : vector<16x1xf32>
    %68 = vector.broadcast %67 : vector<16x1xf32> to vector<16x32xf32>
    %69 = arith.mulf %59, %68 : vector<16x32xf32>
    %70 = vector.broadcast %2 : vector<1x32xf32> to vector<16x32xf32>
    %71 = arith.mulf %69, %70 : vector<16x32xf32>
    %72 = vector.broadcast %3 : vector<1x32xf32> to vector<16x32xf32>
    %73 = arith.addf %71, %72 : vector<16x32xf32>
    %cst_15 = arith.constant 0.000000e+00 : f32
    %74 = vector.broadcast %cst_15 : f32 to vector<16x32xf32>
    %75 = arith.maximumf %73, %74 : vector<16x32xf32>
    %76 = arith.index_cast %7 : i32 to index
    %c0_16 = arith.constant 0 : index
    %77 = vector.load %arg7[%76, %c0_16] : memref<16x32xf32, #tpu.memory_space<vmem>>, vector<16x32xf32>
    tpu.vector_store %arg7[%76, %c0_16], %75 {strides = array<i32>} : memref<16x32xf32, #tpu.memory_space<vmem>>, vector<16x32xf32>,
    %c1_i32_17 = arith.constant 1 : i32
    return
  }
  func.func @transform_0(%arg0: i32) -> (i32, i32) {
    %c0_i32 = arith.constant 0 : i32
    %c0_i32_0 = arith.constant 0 : i32
    return %arg0, %c0_i32 : i32, i32
  }
  func.func @transform_1(%arg0: i32) -> (i32, i32) {
    %c0_i32 = arith.constant 0 : i32
    %c0_i32_0 = arith.constant 0 : i32
    return %arg0, %c0_i32 : i32, i32
  }
  func.func @transform_2(%arg0: i32) -> (i32, i32) {
    %c0_i32 = arith.constant 0 : i32
    %c0_i32_0 = arith.constant 0 : i32
    %c0_i32_1 = arith.constant 0 : i32
    return %c0_i32, %c0_i32_0 : i32, i32
  }
  func.func @transform_3(%arg0: i32) -> (i32, i32) {
    %c0_i32 = arith.constant 0 : i32
    %c0_i32_0 = arith.constant 0 : i32
    %c0_i32_1 = arith.constant 0 : i32
    return %c0_i32, %c0_i32_0 : i32, i32
  }
  func.func @transform_4(%arg0: i32) -> (i32, i32) {
    %c0_i32 = arith.constant 0 : i32
    %c0_i32_0 = arith.constant 0 : i32
    %c0_i32_1 = arith.constant 0 : i32
    return %c0_i32, %c0_i32_0 : i32, i32
  }
  func.func @transform_5(%arg0: i32) -> (i32, i32) {
    %c0_i32 = arith.constant 0 : i32
    %c0_i32_0 = arith.constant 0 : i32
    %c0_i32_1 = arith.constant 0 : i32
    return %c0_i32, %c0_i32_0 : i32, i32
  }
  func.func @transform_6(%arg0: i32) -> (i32, i32) {
    %c0_i32 = arith.constant 0 : i32
    %c0_i32_0 = arith.constant 0 : i32
    return %arg0, %c0_i32 : i32, i32
  }
}

</mosaic_0001>

<llo_original>
// kernel: tpu_custom_call.1
$region0: #{tpu_custom_call.1}
  #allocation0 [shape = 'u32[]', space=smem, size = 0x4, offset = 0x4, fixed_abs, tag = 'smem constant byte address 0x4 - core index']
  #allocation1 [shape = 'u32[144,128]{1,0:T(1,128)}', space=vmem, size = 0x12000, scoped, tag = 'internal scratch']
  %s0 = inlined_call_operand.vmem [shape: f32[32,8], index: 0, kind: input, shape index: {}]
  %s1 = inlined_call_operand.vmem [shape: f32[32,8], index: 1, kind: input, shape index: {}]
  %s2 = inlined_call_operand.vmem [shape: f32[8,256], index: 2, kind: input, shape index: {}]
  %s3 = inlined_call_operand.vmem [shape: f32[1,256], index: 3, kind: input, shape index: {}]
  %s4 = inlined_call_operand.vmem [shape: f32[1,32], index: 4, kind: input, shape index: {}]
  %s5 = inlined_call_operand.vmem [shape: f32[1,32], index: 5, kind: input, shape index: {}]
  %s6 = inlined_call_operand.hbm [shape: f32[32,32], index: 6, kind: output, shape index: {}]
  %s7 = sld [smem:[#allocation0]]
  $region57: #{tpu_custom_call.1} parent=0
    _
  %s9 = ssub.s32 1, %s7
  %s10 = scalar_select 0, %s9, %s7
  $region1: #{tpu_custom_call.1} parent=0
    #allocation2 [shape = 'u8[16384]{0}', space=vmem, size = 0x4000, scoped, tag = 'output window, operand 0']
    #allocation3 [shape = 's32[2]{0}', space=sflag, size = 0x8, scoped, tag = 'scoped memory for tpu_custom_call.1']
    %11 = vsyncpa [#allocation3], 0
    %s12 = scalar_lea.sflag [#allocation3], 1
    %13 = vsyncpa %s12, 0
    loop: start=0, step=1, limit=4
    $region2: #{tpu_custom_call.1} parent=1 // loop_pre_header
      _
    $region3: #{tpu_custom_call.1} parent=1 // loop_header
      %s15 = sphi 0, %s19
      %p16 = scmp.ge.s32.totalorder %s15, 4
      %s25 = sphi 0, %s27
      %s28 = sphi 0, %s25
      %s29 = sphi 0, %s28
      %s45 = sphi 0, %s29
      %s51 = sphi 0, %s53
      %s54 = sphi 0, %s51
      %s55 = sphi 0, %s54
      %s71 = sphi 0, %s55
      %s75 = sphi 0, %s75
      %s77 = sphi 0, %s75
      %s78 = sphi 0, %s77
      %s92 = sphi 0, %s78
      %s96 = sphi 0, %s96
      %s98 = sphi 0, %s96
      %s99 = sphi 0, %s98
      %s113 = sphi 0, %s99
      %s117 = sphi 0, %s117
      %s119 = sphi 0, %s117
      %s120 = sphi 0, %s119
      %s134 = sphi 0, %s120
      %s138 = sphi 0, %s138
      %s140 = sphi 0, %s138
      %s141 = sphi 0, %s140
      %s155 = sphi 0, %s141
      %s161 = sphi 0, %s163
      %s164 = sphi 0, %s161
      %s165 = sphi 0, %s164
      %s181 = sphi 0, %s165
    $region4: #{tpu_custom_call.1} parent=1 // loop_header_branch
      %18 = sbr.rel (%p16) target = $region8
    $region5: #{tpu_custom_call.1} parent=1 // loop_body
      %s20 = ssub.s32 %s15, 1
      %s21 = ssub.s32 %s15, 2
      %s22 = sadd.s32 %s15, 1
      %s23 = ssub.s32 %s15, %s22
      %p24 = scmp.eq.s32.totalorder %s23, 0
      %s26 = sadd.s32 %s25, 1
      %s27 = scalar_select %p24, %s25, %s26
      %p30 = pneg %p24
      %p31 = scmp.eq.s32.totalorder %s15, 1
      %p32 = por %p30, %p31
      %p33 = scmp.ne.s32.totalorder %s25, %s28
      %p34 = scmp.eq.s32.totalorder %s15, 0
      %p35 = por %p33, %p34
      %p36 = scmp.ne.s32.totalorder %s25, %s28
      %p37 = scmp.eq.s32.totalorder %s20, 1
      %p38 = por %p36, %p37
      %p39 = scmp.ne.s32.totalorder %s28, %s29
      %p40 = scmp.eq.s32.totalorder %s20, 0
      %p41 = por %p39, %p40
      %p42 = scmp.ne.s32.totalorder %s28, %s29
      %p43 = scmp.eq.s32.totalorder %s21, 1
      %p44 = por %p42, %p43
      %p46 = scmp.ne.s32.totalorder %s29, %s45
      %p47 = scmp.eq.s32.totalorder %s21, 0
      %p48 = por %p46, %p47
      %s49 = ssub.s32 %s15, %s22
      %p50 = scmp.eq.s32.totalorder %s49, 0
      %s52 = sadd.s32 %s51, 1
      %s53 = scalar_select %p50, %s51, %s52
      %p56 = pneg %p50
      %p57 = scmp.eq.s32.totalorder %s15, 1
      %p58 = por %p56, %p57
      %p59 = scmp.ne.s32.totalorder %s51, %s54
      %p60 = scmp.eq.s32.totalorder %s15, 0
      %p61 = por %p59, %p60
      %p62 = scmp.ne.s32.totalorder %s51, %s54
      %p63 = scmp.eq.s32.totalorder %s20, 1
      %p64 = por %p62, %p63
      %p65 = scmp.ne.s32.totalorder %s54, %s55
      %p66 = scmp.eq.s32.totalorder %s20, 0
      %p67 = por %p65, %p66
      %p68 = scmp.ne.s32.totalorder %s54, %s55
      %p69 = scmp.eq.s32.totalorder %s21, 1
      %p70 = por %p68, %p69
      %p72 = scmp.ne.s32.totalorder %s55, %s71
      %p73 = scmp.eq.s32.totalorder %s21, 0
      %p74 = por %p72, %p73
      %s76 = sadd.s32 %s75, 1
      %p79 = scmp.eq.s32.totalorder %s15, 1
      %p80 = scmp.ne.s32.totalorder %s75, %s77
      %p81 = scmp.eq.s32.totalorder %s15, 0
      %p82 = por %p80, %p81
      %p83 = scmp.ne.s32.totalorder %s75, %s77
      %p84 = scmp.eq.s32.totalorder %s20, 1
      %p85 = por %p83, %p84
      %p86 = scmp.ne.s32.totalorder %s77, %s78
      %p87 = scmp.eq.s32.totalorder %s20, 0
      %p88 = por %p86, %p87
      %p89 = scmp.ne.s32.totalorder %s77, %s78
      %p90 = scmp.eq.s32.totalorder %s21, 1
      %p91 = por %p89, %p90
      %p93 = scmp.ne.s32.totalorder %s78, %s92
      %p94 = scmp.eq.s32.totalorder %s21, 0
      %p95 = por %p93, %p94
      %s97 = sadd.s32 %s96, 1
      %p100 = scmp.eq.s32.totalorder %s15, 1
      %p101 = scmp.ne.s32.totalorder %s96, %s98
      %p102 = scmp.eq.s32.totalorder %s15, 0
      %p103 = por %p101, %p102
      %p104 = scmp.ne.s32.totalorder %s96, %s98
      %p105 = scmp.eq.s32.totalorder %s20, 1
      %p106 = por %p104, %p105
      %p107 = scmp.ne.s32.totalorder %s98, %s99
      %p108 = scmp.eq.s32.totalorder %s20, 0
      %p109 = por %p107, %p108
      %p110 = scmp.ne.s32.totalorder %s98, %s99
      %p111 = scmp.eq.s32.totalorder %s21, 1
      %p112 = por %p110, %p111
      %p114 = scmp.ne.s32.totalorder %s99, %s113
      %p115 = scmp.eq.s32.totalorder %s21, 0
      %p116 = por %p114, %p115
      %s118 = sadd.s32 %s117, 1
      %p121 = scmp.eq.s32.totalorder %s15, 1
      %p122 = scmp.ne.s32.totalorder %s117, %s119
      %p123 = scmp.eq.s32.totalorder %s15, 0
      %p124 = por %p122, %p123
      %p125 = scmp.ne.s32.totalorder %s117, %s119
      %p126 = scmp.eq.s32.totalorder %s20, 1
      %p127 = por %p125, %p126
      %p128 = scmp.ne.s32.totalorder %s119, %s120
      %p129 = scmp.eq.s32.totalorder %s20, 0
      %p130 = por %p128, %p129
      %p131 = scmp.ne.s32.totalorder %s119, %s120
      %p132 = scmp.eq.s32.totalorder %s21, 1
      %p133 = por %p131, %p132
      %p135 = scmp.ne.s32.totalorder %s120, %s134
      %p136 = scmp.eq.s32.totalorder %s21, 0
      %p137 = por %p135, %p136
      %s139 = sadd.s32 %s138, 1
      %p142 = scmp.eq.s32.totalorder %s15, 1
      %p143 = scmp.ne.s32.totalorder %s138, %s140
      %p144 = scmp.eq.s32.totalorder %s15, 0
      %p145 = por %p143, %p144
      %p146 = scmp.ne.s32.totalorder %s138, %s140
      %p147 = scmp.eq.s32.totalorder %s20, 1
      %p148 = por %p146, %p147
      %p149 = scmp.ne.s32.totalorder %s140, %s141
      %p150 = scmp.eq.s32.totalorder %s20, 0
      %p151 = por %p149, %p150
      %p152 = scmp.ne.s32.totalorder %s140, %s141
      %p153 = scmp.eq.s32.totalorder %s21, 1
      %p154 = por %p152, %p153
      %p156 = scmp.ne.s32.totalorder %s141, %s155
      %p157 = scmp.eq.s32.totalorder %s21, 0
      %p158 = por %p156, %p157
      %s159 = ssub.s32 %s15, %s22
      %p160 = scmp.eq.s32.totalorder %s159, 0
      %s162 = sadd.s32 %s161, 1
      %s163 = scalar_select %p160, %s161, %s162
      %p166 = pneg %p160
      %p167 = scmp.eq.s32.totalorder %s15, 1
      %p168 = por %p166, %p167
      %p169 = scmp.ne.s32.totalorder %s161, %s164
      %p170 = scmp.eq.s32.totalorder %s15, 0
      %p171 = por %p169, %p170
      %p172 = scmp.ne.s32.totalorder %s161, %s164
      %p173 = scmp.eq.s32.totalorder %s20, 1
      %p174 = por %p172, %p173
      %p175 = scmp.ne.s32.totalorder %s164, %s165
      %p176 = scmp.eq.s32.totalorder %s20, 0
      %p177 = por %p175, %p176
      %p178 = scmp.ne.s32.totalorder %s164, %s165
      %p179 = scmp.eq.s32.totalorder %s21, 1
      %p180 = por %p178, %p179
      %p182 = scmp.ne.s32.totalorder %s165, %s181
      %p183 = scmp.eq.s32.totalorder %s21, 0
      %p184 = por %p182, %p183
      %p185 = scmp.le.s32.totalorder 1, %s15
      %p186 = scmp.lt.s32.totalorder %s15, 3
      %p187 = pnand %p185, %p186
      %p188 = pneg %p187
      // Predicated region
      $region9: #{tpu_custom_call.1} parent=5 // pred_check
        _
      $region10: #{tpu_custom_call.1} parent=5 // pred_check_branch
        %190 = sbr.rel (%p187) target = $region12
      $region11: #{tpu_custom_call.1} parent=5 // pred_region
        %s191 = ssub.s32 %s15, 1
        // Predicated region
        $region13: #{tpu_custom_call.1} parent=11 // pred_check
          %p192 = pneg %p88
        $region14: #{tpu_custom_call.1} parent=11 // pred_check_branch
          %194 = sbr.rel (%p192) target = $region16
        $region15: #{tpu_custom_call.1} parent=11 // pred_region
          _
        $region16: #{tpu_custom_call.1} parent=11 // pred_fallthru
          _
        // Predicated region
        $region17: #{tpu_custom_call.1} parent=11 // pred_check
          %p195 = pneg %p109
        $region18: #{tpu_custom_call.1} parent=11 // pred_check_branch
          %197 = sbr.rel (%p195) target = $region20
        $region19: #{tpu_custom_call.1} parent=11 // pred_region
          _
        $region20: #{tpu_custom_call.1} parent=11 // pred_fallthru
          _
        // Predicated region
        $region21: #{tpu_custom_call.1} parent=11 // pred_check
          %p198 = pneg %p130
        $region22: #{tpu_custom_call.1} parent=11 // pred_check_branch
          %200 = sbr.rel (%p198) target = $region24
        $region23: #{tpu_custom_call.1} parent=11 // pred_region
          _
        $region24: #{tpu_custom_call.1} parent=11 // pred_fallthru
          _
        // Predicated region
        $region25: #{tpu_custom_call.1} parent=11 // pred_check
          %p201 = pneg %p151
        $region26: #{tpu_custom_call.1} parent=11 // pred_check_branch
          %203 = sbr.rel (%p201) target = $region28
        $region27: #{tpu_custom_call.1} parent=11 // pred_region
          _
        $region28: #{tpu_custom_call.1} parent=11 // pred_fallthru
          _
      $region12: #{tpu_custom_call.1} parent=5 // pred_fallthru
        _
      %p204 = scmp.lt.s32.totalorder %s15, 2
      // Predicated region
      $region29: #{tpu_custom_call.1} parent=5 // pred_check
        %p205 = pneg %p204
      $region30: #{tpu_custom_call.1} parent=5 // pred_check_branch
        %207 = sbr.rel (%p205) target = $region32
      $region31: #{tpu_custom_call.1} parent=5 // pred_region
        // Predicated region
        $region33: #{tpu_custom_call.1} parent=31 // pred_check
          %p208 = pneg %p35
        $region34: #{tpu_custom_call.1} parent=31 // pred_check_branch
          %210 = sbr.rel (%p208) target = $region36
        $region35: #{tpu_custom_call.1} parent=31 // pred_region
          %s211 = smul.u32 2, %s15
          %p212 = scmp.lt.s32.totalorder %s211, 3
          %s213 = scalar_select %p212, %s211, 3
          %s214 = smul.addr %s213, 8
          %s215 = scalar_lea.vmem %s0, %s214
          %s216 = smul.u32 2, %s15
        $region36: #{tpu_custom_call.1} parent=31 // pred_fallthru
          _
        // Predicated region
        $region37: #{tpu_custom_call.1} parent=31 // pred_check
          %p217 = pneg %p61
        $region38: #{tpu_custom_call.1} parent=31 // pred_check_branch
          %219 = sbr.rel (%p217) target = $region40
        $region39: #{tpu_custom_call.1} parent=31 // pred_region
          %s220 = smul.u32 2, %s15
          %p221 = scmp.lt.s32.totalorder %s220, 3
          %s222 = scalar_select %p221, %s220, 3
          %s223 = smul.addr %s222, 8
          %s224 = scalar_lea.vmem %s1, %s223
          %s225 = smul.u32 2, %s15
        $region40: #{tpu_custom_call.1} parent=31 // pred_fallthru
          _
      $region32: #{tpu_custom_call.1} parent=5 // pred_fallthru
        _
      %p226 = scmp.le.s32.totalorder 1, %s15
      %p227 = scmp.lt.s32.totalorder %s15, 3
      %p228 = pnand %p226, %p227
      %p229 = pneg %p228
      // Predicated region
      $region41: #{tpu_custom_call.1} parent=5 // pred_check
        _
      $region42: #{tpu_custom_call.1} parent=5 // pred_check_branch
        %231 = sbr.rel (%p228) target = $region44
      $region43: #{tpu_custom_call.1} parent=5 // pred_region
        %s232 = ssub.s32 %s15, 1
        %s233 = smul.u32 2, %s20
        %p234 = scmp.lt.s32.totalorder %s233, 3
        %s235 = scalar_select %p234, %s233, 3
        %s236 = smul.addr %s235, 8
        %s237 = scalar_lea.vmem %s0, %s236
        %p238 = pneg %p41
        %p239 = pneg %p38
        %s240 = smul.u32 2, %s20
        %p241 = scmp.lt.s32.totalorder %s240, 3
        %s242 = scalar_select %p241, %s240, 3
        %s243 = smul.addr %s242, 8
        %s244 = scalar_lea.vmem %s1, %s243
        %p245 = pneg %p67
        %p246 = pneg %p64
        %p247 = pneg %p88
        %p248 = pneg %p85
        %p249 = pneg %p109
        %p250 = pneg %p106
        %p251 = pneg %p130
        %p252 = pneg %p127
        %p253 = pneg %p151
        %p254 = pneg %p148
        %p255 = pneg %p177
        %p256 = pneg %p174
        %s257 = sand.u32 %s164, 1
        %s258 = scalar_lea.sflag [#allocation3], %s257
        %s259 = sand.u32 %s164, 1
        %s260 = smul.addr %s259, 16
        %s261 = scalar_lea.vmem [#allocation2], %s260
        %s262 = smul.u32 2, %s20
        %p263 = scmp.lt.s32.totalorder %s262, 3
        %s264 = scalar_select %p263, %s262, 3
        %s265 = smul.addr %s264, 8
        %s266 = scalar_lea.vmem %s0, %s265
        %s267 = smul.u32 2, %s20
        %s268 = smul.u32 2, %s20
        %p269 = scmp.lt.s32.totalorder %s268, 3
        %s270 = scalar_select %p269, %s268, 3
        %s271 = smul.addr %s270, 8
        %s272 = scalar_lea.vmem %s1, %s271
        %s273 = smul.u32 2, %s20
        %s274 = smul.u32 2, %s20
        %v275 = vld [vmem:[%s2] sm:$0xff]
        %v276 = vld [vmem:[%s2 + $0x8] sm:$0xff]
        %v277 = vld [vmem:[%s3] sm:$0x3]
        %v278 = vld [vmem:[%s4] sm:$0x1]
        %v279 = vld [vmem:[%s5] sm:$0x1]
        %v280 = vld [vmem:[%s272] sm:$0xff]
        %v281 = vld [vmem:[%s272 + $0x8] sm:$0xff]
        %v282 = vld [vmem:[%s266] sm:$0xff]
        %v283 = vld [vmem:[%s266 + $0x8] sm:$0xff]
        %v285 = vlaneseq
        %v286 = vshrl.u32 %v285, 7
        %v287 = vsub.s32 0, %v286
        %v288 = vrot.slane %v277, %v287
        %v289 = vlaneseq
        %v290 = vshrl.u32 %v289, 7
        %v291 = vsub.s32 1, %v290
        %v292 = vrot.slane %v277, %v291
        %vm295 = vcmask 64512
        %v297 = vsel %vm295, %v280, 0
        %v300 = vsel %vm295, %v281, 0
        %302 = vmatprep.subr.mxu0 %v276
        %303 = vmatpush1.msra.mxu0 %v275
        %304 = vmatprep.subr.mxu0 0.0
        %305 = vmatpush1.msra.mxu0 0.0
        %306 = vmatprep.subr.mxu0 0.0
        %307 = vmatpush1.msra.mxu0 0.0
        %308 = vmatprep.subr.mxu0 0.0
        %309 = vmatpush1.msra.mxu0 0.0
        %310 = vmatprep.subr.mxu0 0.0
        %311 = vmatpush1.msra.mxu0 0.0
        %312 = vmatprep.subr.mxu0 0.0
        %313 = vmatpush1.msra.mxu0 0.0
        %314 = vmatprep.subr.mxu0 0.0
        %315 = vmatpush1.msra.mxu0 0.0
        %316 = vmatprep.subr.mxu0 0.0
        %317 = vmatpush1.msra.mxu0 0.0
        %318 = vmatprep.subr.mxu0 0.0
        %319 = vmatpush1.msra.mxu0 0.0
        %320 = vmatprep.subr.mxu0 0.0
        %321 = vmatpush1.msra.mxu0 0.0
        %322 = vmatprep.subr.mxu0 0.0
        %323 = vmatpush1.msra.mxu0 0.0
        %324 = vmatprep.subr.mxu0 0.0
        %325 = vmatpush1.msra.mxu0 0.0
        %326 = vmatprep.subr.mxu0 0.0
        %327 = vmatpush1.msra.mxu0 0.0
        %328 = vmatprep.subr.mxu0 0.0
        %329 = vmatpush1.msra.mxu0 0.0
        %330 = vmatprep.subr.mxu0 0.0
        %331 = vmatpush1.msra.mxu0 0.0
        %332 = vmatprep.subr.mxu0 0.0
        %333 = vmatpush1.msra.mxu0 0.0
        %334 = vmatprep.subr.mxu0 0.0
        %335 = vmatpush1.msra.mxu0 0.0
        %336 = vmatprep.subr.mxu0 0.0
        %337 = vmatpush1.msra.mxu0 0.0
        %338 = vmatprep.subr.mxu0 0.0
        %339 = vmatpush1.msra.mxu0 0.0
        %340 = vmatprep.subr.mxu0 0.0
        %341 = vmatpush1.msra.mxu0 0.0
        %342 = vmatprep.subr.mxu0 0.0
        %343 = vmatpush1.msra.mxu0 0.0
        %344 = vmatprep.subr.mxu0 0.0
        %345 = vmatpush1.msra.mxu0 0.0
        %346 = vmatprep.subr.mxu0 0.0
        %347 = vmatpush1.msra.mxu0 0.0
        %348 = vmatprep.subr.mxu0 0.0
        %349 = vmatpush1.msra.mxu0 0.0
        %350 = vmatprep.subr.mxu0 0.0
        %351 = vmatpush1.msra.mxu0 0.0
        %352 = vmatprep.subr.mxu0 0.0
        %353 = vmatpush1.msra.mxu0 0.0
        %354 = vmatprep.subr.mxu0 0.0
        %355 = vmatpush1.msra.mxu0 0.0
        %356 = vmatprep.subr.mxu0 0.0
        %357 = vmatpush1.msra.mxu0 0.0
        %358 = vmatprep.subr.mxu0 0.0
        %359 = vmatpush1.msra.mxu0 0.0
        %360 = vmatprep.subr.mxu0 0.0
        %361 = vmatpush1.msra.mxu0 0.0
        %362 = vmatprep.subr.mxu0 0.0
        %363 = vmatpush1.msra.mxu0 0.0
        %364 = vmatprep.subr.mxu0 0.0
        %365 = vmatpush1.msra.mxu0 0.0
        %366 = vmatprep.mubr.f32.mxu0 0.0
        %367 = vmatmul.mubr.f32.gmra.mrb[0].mxu0 %v297
        %v368 = vpop.f32.mrb[0].mxu0
        %v369 = vadd.f32 %v288, %v368
        %v370 = vpop.f32.mrb[0].mxu0
        %v371 = vadd.f32 %v292, %v370
        %372 = vmatprep.mubr.f32.mxu0 0.0
        %373 = vmatmul.mubr.f32.gmra.mrb[0].mxu0 %v300
        %v374 = vpop.f32.mrb[0].mxu0
        %v375 = vadd.f32 %v288, %v374
        %v376 = vpop.f32.mrb[0].mxu0
        %v377 = vadd.f32 %v292, %v376
        %378 = vdwg.mxu0
        %380 = vset.pattern.permute.xlu0 0
        %381 = vperm.xlu0 %380, %v282
        %v382 = vpop.permute.xlu0 %381
        %385 = vset.pattern.permute.xlu0 0
        %386 = vperm.xlu0 %385, %v283
        %v387 = vpop.permute.xlu0 %386
        %v389 = vmul.f32 %v382, %v369
        %v390 = vmul.f32 %v387, %v375
        %391 = vset.pattern.permute.xlu0 1
        %392 = vperm.xlu0 %391, %v282
        %v393 = vpop.permute.xlu0 %392
        %395 = vset.pattern.permute.xlu0 1
        %396 = vperm.xlu0 %395, %v283
        %v397 = vpop.permute.xlu0 %396
        %v399 = vmul.f32 %v393, %v369
        %v400 = vmul.f32 %v397, %v375
        %403 = vrot.lane.b32.xlu0 %v399, 96
        %v404 = vpop.permute.xlu0 %403
        %405 = vrot.lane.b32.xlu0 %v400, 96
        %v406 = vpop.permute.xlu0 %405
        %v409 = vadd.f32 %v389, %v404
        %v410 = vadd.f32 %v390, %v406
        %411 = vset.pattern.permute.xlu0 2
        %412 = vperm.xlu0 %411, %v282
        %v413 = vpop.permute.xlu0 %412
        %415 = vset.pattern.permute.xlu0 2
        %416 = vperm.xlu0 %415, %v283
        %v417 = vpop.permute.xlu0 %416
        %v419 = vmul.f32 %v413, %v369
        %v420 = vmul.f32 %v417, %v375
        %423 = vrot.lane.b32.xlu0 %v419, 64
        %v424 = vpop.permute.xlu0 %423
        %425 = vrot.lane.b32.xlu0 %v420, 64
        %v426 = vpop.permute.xlu0 %425
        %v429 = vadd.f32 %v409, %v424
        %v430 = vadd.f32 %v410, %v426
        %431 = vset.pattern.permute.xlu0 3
        %432 = vperm.xlu0 %431, %v282
        %v433 = vpop.permute.xlu0 %432
        %435 = vset.pattern.permute.xlu0 3
        %436 = vperm.xlu0 %435, %v283
        %v437 = vpop.permute.xlu0 %436
        %v439 = vmul.f32 %v433, %v369
        %v440 = vmul.f32 %v437, %v375
        %443 = vrot.lane.b32.xlu0 %v439, 32
        %v444 = vpop.permute.xlu0 %443
        %445 = vrot.lane.b32.xlu0 %v440, 32
        %v446 = vpop.permute.xlu0 %445
        %v449 = vadd.f32 %v429, %v444
        %v450 = vadd.f32 %v430, %v446
        %451 = vset.pattern.permute.xlu0 4
        %452 = vperm.xlu0 %451, %v282
        %v453 = vpop.permute.xlu0 %452
        %455 = vset.pattern.permute.xlu0 4
        %456 = vperm.xlu0 %455, %v283
        %v457 = vpop.permute.xlu0 %456
        %v459 = vmul.f32 %v453, %v371
        %v460 = vmul.f32 %v457, %v377
        %v461 = vadd.f32 %v449, %v459
        %v462 = vadd.f32 %v450, %v460
        %463 = vset.pattern.permute.xlu0 5
        %464 = vperm.xlu0 %463, %v282
        %v465 = vpop.permute.xlu0 %464
        %467 = vset.pattern.permute.xlu0 5
        %468 = vperm.xlu0 %467, %v283
        %v469 = vpop.permute.xlu0 %468
        %v471 = vmul.f32 %v465, %v371
        %v472 = vmul.f32 %v469, %v377
        %475 = vrot.lane.b32.xlu0 %v471, 96
        %v476 = vpop.permute.xlu0 %475
        %477 = vrot.lane.b32.xlu0 %v472, 96
        %v478 = vpop.permute.xlu0 %477
        %v481 = vadd.f32 %v461, %v476
        %v482 = vadd.f32 %v462, %v478
        %483 = vset.pattern.permute.xlu0 6
        %484 = vperm.xlu0 %483, %v282
        %v485 = vpop.permute.xlu0 %484
        %487 = vset.pattern.permute.xlu0 6
        %488 = vperm.xlu0 %487, %v283
        %v489 = vpop.permute.xlu0 %488
        %v491 = vmul.f32 %v485, %v371
        %v492 = vmul.f32 %v489, %v377
        %495 = vrot.lane.b32.xlu0 %v491, 64
        %v496 = vpop.permute.xlu0 %495
        %497 = vrot.lane.b32.xlu0 %v492, 64
        %v498 = vpop.permute.xlu0 %497
        %v501 = vadd.f32 %v481, %v496
        %v502 = vadd.f32 %v482, %v498
        %503 = vset.pattern.permute.xlu0 7
        %504 = vperm.xlu0 %503, %v282
        %v505 = vpop.permute.xlu0 %504
        %507 = vset.pattern.permute.xlu0 7
        %508 = vperm.xlu0 %507, %v283
        %v509 = vpop.permute.xlu0 %508
        %v511 = vmul.f32 %v505, %v371
        %v512 = vmul.f32 %v509, %v377
        %515 = vrot.lane.b32.xlu0 %v511, 32
        %v516 = vpop.permute.xlu0 %515
        %517 = vrot.lane.b32.xlu0 %v512, 32
        %v518 = vpop.permute.xlu0 %517
        %v521 = vadd.f32 %v501, %v516
        %v522 = vadd.f32 %v502, %v518
        %vm523 = vcmask 261120
        %v524 = vsel %vm523, %v521, 0.0
        %525 = vadd.xlane.f32.xlu0 %v524
        %v526 = vpop.xlane.xlu0 %525
        %v527 = vsel %vm523, %v522, 0.0
        %528 = vadd.xlane.f32.xlu0 %v527
        %v529 = vpop.xlane.xlu0 %528
        %v530 = vrcp.pop 32.0
        %v531 = vmul.f32 %v526, %v530
        %v532 = vmul.f32 %v529, %v530
        %v533 = vsub.f32 %v521, %v531
        %v534 = vsub.f32 %v522, %v532
        %v535 = vmul.f32 %v533, %v533
        %v536 = vmul.f32 %v534, %v534
        %v537 = vsel %vm523, %v535, 0.0
        %538 = vadd.xlane.f32.xlu0 %v537
        %v539 = vpop.xlane.xlu0 %538
        %v540 = vsel %vm523, %v536, 0.0
        %541 = vadd.xlane.f32.xlu0 %v540
        %v542 = vpop.xlane.xlu0 %541
        %v543 = vmul.f32 %v539, %v530
        %v544 = vmul.f32 %v542, %v530
        %v545 = vadd.f32 %v543, 1e-05
        %v546 = vadd.f32 %v544, 1e-05
        %v547 = vrsqrt.pop %v545
        %v548 = vrsqrt.pop %v546
        %v549 = vmul.f32 %v533, %v547
        %v550 = vmul.f32 %v534, %v548
        %v552 = vlaneseq
        %v553 = vshrl.u32 %v552, 7
        %v554 = vsub.s32 0, %v553
        %v555 = vrot.slane %v278, %v554
        %v557 = vmul.f32 %v549, %v555
        %v558 = vmul.f32 %v550, %v555
        %v560 = vlaneseq
        %v561 = vshrl.u32 %v560, 7
        %v562 = vsub.s32 0, %v561
        %v563 = vrot.slane %v279, %v562
        %v565 = vadd.f32 %v557, %v563
        %v566 = vadd.f32 %v558, %v563
        %v567 = vmax.f32 %v565, 0.0
        %v568 = vmax.f32 %v566, 0.0
        %569 = vst.msk [vmem:[%s261] sm:$0xff] %vm523, %v567
        %570 = vst.msk [vmem:[%s261 + $0x8] sm:$0xff] %vm523, %v568
        %s571 = sand.u32 %s164, 1
        %s572 = scalar_lea.sflag [#allocation3], %s571
        %s573 = sand.u32 %s164, 1
        %s574 = smul.addr %s573, 16
        %s575 = scalar_lea.vmem [#allocation2], %s574
        // Predicated region
        $region45: #{tpu_custom_call.1} parent=43 // pred_check
          %p576 = pneg %p174
        $region46: #{tpu_custom_call.1} parent=43 // pred_check_branch
          %578 = sbr.rel (%p576) target = $region48
        $region47: #{tpu_custom_call.1} parent=43 // pred_region
          %s579 = smul.u32 2, %s20
          %s581 = ssub.s32 256, 256
          %582 = vsyncadd %s572, %s581
          %s583 = smul.addr %s579, 128
          %s584 = scalar_lea.hbm %s6, %s583
          %s585 = sshll.u32 %s575, 4
          %s586 = int_to_ptr.vmem [resolvable:$true] %s585
          %591 = dma.vmem_to_hbm [thread:$0]  %s586, 256, %s584, %s572, 128, 128, 8
        $region48: #{tpu_custom_call.1} parent=43 // pred_fallthru
          _
      $region44: #{tpu_custom_call.1} parent=5 // pred_fallthru
        _
      %p592 = scmp.le.s32.totalorder 2, %s15
      // Predicated region
      $region49: #{tpu_custom_call.1} parent=5 // pred_check
        %p593 = pneg %p592
      $region50: #{tpu_custom_call.1} parent=5 // pred_check_branch
        %595 = sbr.rel (%p593) target = $region52
      $region51: #{tpu_custom_call.1} parent=5 // pred_region
        %s596 = ssub.s32 %s15, 2
        // Predicated region
        $region53: #{tpu_custom_call.1} parent=51 // pred_check
          %p597 = pneg %p180
        $region54: #{tpu_custom_call.1} parent=51 // pred_check_branch
          %599 = sbr.rel (%p597) target = $region56
        $region55: #{tpu_custom_call.1} parent=51 // pred_region
          %s600 = sand.u32 %s165, 1
          %s601 = scalar_lea.sflag [#allocation3], %s600
          %s602 = sand.u32 %s165, 1
          %s603 = smul.addr %s602, 16
          %s604 = scalar_lea.vmem [#allocation2], %s603
          %605 = dma.done %s601, 256
        $region56: #{tpu_custom_call.1} parent=51 // pred_fallthru
          _
      $region52: #{tpu_custom_call.1} parent=5 // pred_fallthru
        _
    $region6: #{tpu_custom_call.1} parent=1 // loop_footer
      %s19 = sadd.s32 1, %s15
    $region7: #{tpu_custom_call.1} parent=1 // loop_footer_branch
      %14 = sbr.rel target = $region3
    $region8: #{tpu_custom_call.1} parent=1 // loop_exit
      _
    %606 = vsyncpa [#allocation3], 1
    %s607 = scalar_lea.sflag [#allocation3], 1
    %608 = vsyncpa %s607, 1

</llo_original>
